<compile_context>
chip_gen: v6e
topology: v6e:2x2x1
jax: 0.10.0
libtpu: 0.0.40
codegen_flags: <defaults>
</compile_context>

<pallas_src>
import math

import jax
import jax.numpy as jnp
from jax.experimental import pallas as pl
from jax.experimental.pallas import tpu as pltpu

_LOG_2PI = math.log(2.0 * math.pi)

_MAX_TILE_B = 2048                      # rows; diminishing returns past ~85% roofline
_VMEM_INPUT_BUDGET = 8 * 1024 * 1024    # bytes for the double-buffered input tile
                                        # (safe vs v5e 16 MiB / v6e 32 MiB / v7x 32 MiB scoped)


def _choose_tile_b(n_rows: int, d: int, itemsize: int) -> int:
    """Largest batch tile that keeps 2 input buffers under the VMEM budget.

    Rounded to a multiple of 128 when possible (unmasked lane-dense output
    stores), otherwise to a multiple of 8 (sublane granularity).
    """
    max_rows = _VMEM_INPUT_BUDGET // (2 * d * itemsize)
    tile = min(_MAX_TILE_B, max_rows, n_rows)
    if tile >= 128:
        tile = (tile // 128) * 128
    else:
        tile = (tile // 8) * 8
    return max(8, tile)


def _flow_density_kernel(z_ref, logp_ref):
    """Standard-Normal log-density for one batch tile.

    z_ref:    (tile_b, D)      input dtype (f32 or bf16), rows = samples
    logp_ref: (1, 1, tile_b)   f32, batch on the lane axis (lane-dense store)
    """
    z = z_ref[...].astype(jnp.float32)                  # upcast in-kernel only
    d = z.shape[-1]
    ssq = jnp.sum(z * z, axis=-1)                       # (tile_b,)  VPU mul + XLU reduce
    logp = -0.5 * ssq + (-0.5 * d * _LOG_2PI)           # hoisted constant, per-row add
    logp_ref[...] = logp[None, None, :]                 # relayout -> lane-dense slab


def flow_density_log_prob(z, *, tile_b=None):
    """log p(z) under N(0, I), computed in a Pallas TPU kernel.

    z: [B, D] array (f32 or bf16).  Returns [B, 1] float32.
    """
    B, D = z.shape
    itemsize = jnp.dtype(z.dtype).itemsize
    if tile_b is None:
        tile_b = _choose_tile_b(B, D, itemsize)
    else:
        tile_b = int(tile_b)
        if tile_b >= 128:
            tile_b = (tile_b // 128) * 128
        else:
            tile_b = max(8, (tile_b // 8) * 8)

    n_tiles = pl.cdiv(B, tile_b)
    b_pad = n_tiles * tile_b
    if b_pad != B:
        # Pad rows with zeros; padded rows are sliced off after the call.
        z = jnp.pad(z, ((0, b_pad - B), (0, 0)))

    cost = pl.CostEstimate(
        flops=2 * b_pad * D,
        transcendentals=0,
        bytes_accessed=b_pad * D * itemsize + b_pad * 4,
    )

    out = pl.pallas_call(
        _flow_density_kernel,
        out_shape=jax.ShapeDtypeStruct((n_tiles, 1, tile_b), jnp.float32),
        grid_spec=pltpu.PrefetchScalarGridSpec(
            num_scalar_prefetch=0,
            grid=(n_tiles,),
            in_specs=[pl.BlockSpec((tile_b, D), lambda i: (i, 0))],
            out_specs=pl.BlockSpec((1, 1, tile_b), lambda i: (i, 0, 0)),
        ),
        compiler_params=pltpu.CompilerParams(
            dimension_semantics=("parallel",)),
        cost_estimate=cost,
    )(z)

    # Lane-dense slab -> (B, 1) column, dropping any padded rows.
    return out.reshape(-1)[:B].reshape(B, 1)


def flow_density_log_prob_ref(z):
    """Pure-JAX reference for correctness checking."""
    z = z.astype(jnp.float32)
    return jnp.sum(-0.5 * z * z - 0.5 * _LOG_2PI, axis=-1, keepdims=True)


if __name__ == "__main__":
    key = jax.random.PRNGKey(0)

    # Small latent batch consistent with the module: 8 samples, 32-dim latent.
    B, Dm = 8, 32
    z = jax.random.normal(key, (B, Dm), dtype=jnp.float32)

    out = jax.block_until_ready(flow_density_log_prob(z))
    ref = flow_density_log_prob_ref(z)
    assert out.shape == (B, 1)
    assert jnp.allclose(out, ref, atol=1e-5, rtol=1e-5), "f32 mismatch vs reference"

    # Non-multiple batch (exercises padding path).
    z2 = jax.random.normal(jax.random.PRNGKey(1), (10, Dm), dtype=jnp.float32)
    out2 = jax.block_until_ready(flow_density_log_prob(z2))
    ref2 = flow_density_log_prob_ref(z2)
    assert out2.shape == (10, 1)
    assert jnp.allclose(out2, ref2, atol=1e-5, rtol=1e-5), "padded-batch mismatch"

    # Larger batch exercising the 128-multiple lane-dense tile path.
    z3 = jax.random.normal(jax.random.PRNGKey(2), (300, Dm), dtype=jnp.float32)
    out3 = jax.block_until_ready(flow_density_log_prob(z3))
    ref3 = flow_density_log_prob_ref(z3)
    assert out3.shape == (300, 1)
    assert jnp.allclose(out3, ref3, atol=1e-5, rtol=1e-5), "large-batch mismatch"

    # bf16 input streams as bf16 (no wrapper upcast), upcast happens in-kernel.
    z4 = z.astype(jnp.bfloat16)
    out4 = jax.block_until_ready(flow_density_log_prob(z4))
    ref4 = flow_density_log_prob_ref(z4)
    assert jnp.allclose(out4, ref4, atol=1e-2, rtol=1e-2), "bf16 mismatch"

    print("KERNEL_OK")
</pallas_src>

<mosaic_0001>
module attributes {stable_mosaic.version = 11 : i64} {
  func.func @_flow_density_kernel(%arg0: i32, %arg1: memref<8x32xf32, #tpu.memory_space<vmem>>, %arg2: memref<1x1x8xf32, #tpu.memory_space<vmem>>) attributes {dimension_semantics = [#tpu.dimension_semantics<parallel>], iteration_bounds = array<i64: 1>, scalar_prefetch = 0 : i64, scratch_operands = 0 : i64, tpu.core_type = #tpu.core_type<tc>, window_params = [{transform_indices = @transform_0, window_bounds = array<i64: 8, 32>}, {transform_indices = @transform_1, window_bounds = array<i64: 1, 1, 8>}]} {
    %c0 = arith.constant 0 : index
    %c0_0 = arith.constant 0 : index
    %0 = vector.load %arg1[%c0, %c0_0] : memref<8x32xf32, #tpu.memory_space<vmem>>, vector<8x32xf32>
    %1 = arith.mulf %0, %0 : vector<8x32xf32>
    %cst = arith.constant dense<0.000000e+00> : vector<8xf32>
    %2 = vector.multi_reduction <add>, %1, %cst [1] : vector<8x32xf32> to vector<8xf32>
    %cst_1 = arith.constant -5.000000e-01 : f32
    %3 = vector.broadcast %cst_1 : f32 to vector<8xf32>
    %4 = arith.mulf %3, %2 : vector<8xf32>
    %cst_2 = arith.constant -29.4060326 : f32
    %5 = vector.broadcast %cst_2 : f32 to vector<8xf32>
    %6 = arith.addf %4, %5 : vector<8xf32>
    %7 = vector.shape_cast %6 : vector<8xf32> to vector<1x1x8xf32>
    %c0_3 = arith.constant 0 : index
    %c0_4 = arith.constant 0 : index
    %c0_5 = arith.constant 0 : index
    %8 = vector.load %arg2[%c0_3, %c0_4, %c0_5] : memref<1x1x8xf32, #tpu.memory_space<vmem>>, vector<1x1x8xf32>
    tpu.vector_store %arg2[%c0_3, %c0_4, %c0_5], %7 {strides = array<i32>} : memref<1x1x8xf32, #tpu.memory_space<vmem>>, vector<1x1x8xf32>,
    return
  }
  func.func @transform_0(%arg0: i32) -> (i32, i32) {
    %c0_i32 = arith.constant 0 : i32
    %c0_i32_0 = arith.constant 0 : i32
    return %arg0, %c0_i32 : i32, i32
  }
  func.func @transform_1(%arg0: i32) -> (i32, i32, i32) {
    %c0_i32 = arith.constant 0 : i32
    %c0_i32_0 = arith.constant 0 : i32
    %c0_i32_1 = arith.constant 0 : i32
    return %arg0, %c0_i32, %c0_i32_0 : i32, i32, i32
  }
}

</mosaic_0001>

<llo_original>
// kernel: tpu_custom_call.1
$region0: #{tpu_custom_call.1}
  #allocation0 [shape = 'u32[]', space=smem, size = 0x4, offset = 0x4, fixed_abs, tag = 'smem constant byte address 0x4 - core index']
  #allocation1 [shape = 'u32[144,128]{1,0:T(1,128)}', space=vmem, size = 0x12000, scoped, tag = 'internal scratch']
  %s0 = inlined_call_operand.hbm [shape: f32[8,32], index: 0, kind: input, shape index: {}]
  %s1 = inlined_call_operand.hbm [shape: f32[1,1,8], index: 1, kind: output, shape index: {}]
  %s2 = sld [smem:[#allocation0]]
  $region18: #{tpu_custom_call.1} parent=0
    _
  %s4 = ssub.s32 1, %s2
  %s5 = scalar_select 0, %s4, %s2
  $region1: #{tpu_custom_call.1} parent=0
    #allocation2 [shape = 'u8[4096]{0}', space=vmem, size = 0x1000, scoped, tag = 'input window, operand 0, single buffered']
    #allocation3 [shape = 's32[1]{0}', space=sflag, size = 0x4, scoped, tag = 'scoped memory for tpu_custom_call.1']
    #allocation4 [shape = 's32[1]{0}', space=sflag, size = 0x4, scoped, tag = 'scoped memory for tpu_custom_call.1']
    #allocation5 [shape = 'u8[512]{0}', space=vmem, size = 0x400, scoped, tag = 'output window, operand 0, single buffered']
    %6 = vsyncpa [#allocation3], 0
    %7 = vsyncpa [#allocation4], 0
    // Predicated region
    $region2: #{tpu_custom_call.1} parent=1 // pred_check
      _
    $region3: #{tpu_custom_call.1} parent=1 // pred_check_branch
      %9 = sbr.rel (0) target = $region5
    $region4: #{tpu_custom_call.1} parent=1 // pred_region
      %s11 = ssub.s32 128, 128
      %12 = vsyncadd [#allocation3], %s11
      %s14 = sshll.u32 [#allocation2], 4
      %s15 = int_to_ptr.vmem [resolvable:$true] %s14
      %17 = dma.hbm_to_vmem [thread:$0]  %s0, 128, %s15, [#allocation3]
    $region5: #{tpu_custom_call.1} parent=1 // pred_fallthru
      _
    // Predicated region
    $region6: #{tpu_custom_call.1} parent=1 // pred_check
      _
    $region7: #{tpu_custom_call.1} parent=1 // pred_check_branch
      %19 = sbr.rel (0) target = $region9
    $region8: #{tpu_custom_call.1} parent=1 // pred_region
      %20 = dma.done [#allocation3], 128
    $region9: #{tpu_custom_call.1} parent=1 // pred_fallthru
      _
    %v21 = vld [vmem:[#allocation2] sm:$0xff]
    %v22 = vmul.f32 %v21, %v21
    %vm23 = vcmask 261120
    %v24 = vsel %vm23, %v22, 0.0
    %25 = vadd.xlane.f32.xlu0 %v24
    %v26 = vpop.xlane.xlu0 %25
    %v27 = vmul.f32 %v26, -0.5
    %v28 = vadd.f32 %v27, -29.406033
    %v30 = vlaneseq
    %v31 = vand.u32 %v30, 127
    %v32 = vlaneseq
    %v33 = vshrl.u32 %v32, 7
    %v34 = vsub.s32 %v31, %v33
    %v35 = vrot.slane %v28, %v34
    %vm37 = vcmask 57344
    %38 = vst.msk [vmem:[#allocation5] sm:$0x1] %vm37, %v35
    // Predicated region
    $region10: #{tpu_custom_call.1} parent=1 // pred_check
      _
    $region11: #{tpu_custom_call.1} parent=1 // pred_check_branch
      %40 = sbr.rel (0) target = $region13
    $region12: #{tpu_custom_call.1} parent=1 // pred_region
      %s42 = ssub.s32 16, 16
      %43 = vsyncadd [#allocation4], %s42
      %s45 = sshll.u32 [#allocation5], 4
      %s46 = int_to_ptr.vmem [resolvable:$true] %s45
      %48 = dma.vmem_to_hbm [thread:$0]  %s46, 16, %s1, [#allocation4]
    $region13: #{tpu_custom_call.1} parent=1 // pred_fallthru
      _
    // Predicated region
    $region14: #{tpu_custom_call.1} parent=1 // pred_check
      _
    $region15: #{tpu_custom_call.1} parent=1 // pred_check_branch
      %50 = sbr.rel (0) target = $region17
    $region16: #{tpu_custom_call.1} parent=1 // pred_region
      %51 = dma.done [#allocation4], 16
    $region17: #{tpu_custom_call.1} parent=1 // pred_fallthru
      _
    %52 = vsyncpa [#allocation3], 1
    %53 = vsyncpa [#allocation4], 1

</llo_original>
